<compile_context>
chip_gen: v7x
topology: tpu7x:2x2x1
jax: 0.10.0
libtpu: 0.0.40
codegen_flags: <defaults>
</compile_context>

<pallas_src>
import functools
from typing import NamedTuple

import jax
import jax.numpy as jnp
from jax.experimental import pallas as pl
from jax.experimental.pallas import tpu as pltpu

_MIB = 1024 * 1024
_TK_CAP = 32768          # keep a handful of pipeline stages even for huge h*w
_TK_MIN_TILED = 2048     # v5e: amortise the (TM, M) accumulator store traffic


def _vmem_limit_bytes():
    """Generation-aware scoped-VMEM limit (~80% of physical, capped at 100 MiB)."""
    cap = 128 * _MIB
    try:
        cap = int(getattr(pltpu.get_tpu_info(), "vmem_capacity_bytes", cap))
    except Exception:
        pass
    return int(min(int(cap * 0.8), 100 * _MIB))


def _pick_tm(m):
    """Row-block size: full M when small; a divisor of M (multiple of 8) when large."""
    if m < 1024:
        return m
    for t in (512, 256, 128, 64, 32, 16, 8):
        if m % t == 0:
            return t
    return m


class _Plan(NamedTuple):
    tm: int
    tk: int
    grid_m: int
    grid_k: int
    split_rows: bool
    has_tail: bool
    vmem_limit: int
    feat_buffers: int     # 0 -> default double-buffering


def _plan(m, k, itemsize):
    tm = _pick_tm(m)
    split_rows = tm != m
    limit = _vmem_limit_bytes()
    # Resident fp32 buffers (accumulator + style rows / double-buffered out).
    resident = 3 * tm * m * 4
    stream_rows = tm + (m if split_rows else 0)
    per_tk = 2 * stream_rows * itemsize           # double-buffered feature streams
    avail = max(limit - 4 * _MIB - resident, per_tk * 512)
    max_tk = max(avail // per_tk, 512)
    if k <= min(max_tk, _TK_CAP):
        tk, grid_k, has_tail = k, 1, False        # single full-K block, no mask
    else:
        # Largest lane-aligned tile fitting the budget (naturally >= 2048 unless
        # the budget is tight for huge M); prefer a tk dividing K (no tail mask).
        tk = int(min((max_tk // 512) * 512, _TK_CAP))
        tk = max(tk, 512)
        for cand in range(tk, max(tk // 2, 511), -512):
            if k % cand == 0:
                tk = cand
                break
        grid_k = -(-k // tk)
        has_tail = (k % tk) != 0
    # Deeper pipelining only pays in the tiny-M, many-step, DMA-latency regime.
    feat_buffers = 3 if (not split_rows and grid_k >= 3 and m <= 128) else 0
    return _Plan(tm, tk, m // tm, grid_k, split_rows, has_tail, limit, feat_buffers)


def _feat_spec(shape, index_map, buffers):
    """BlockSpec for the streamed feature tiles, optionally with deeper buffering."""
    if buffers:
        try:
            return pl.BlockSpec(shape, index_map, pipeline_mode=pl.Buffered(buffers))
        except Exception:           # pipeline_mode unavailable -> default depth
            pass
    return pl.BlockSpec(shape, index_map)


def _masked(tile_ref, k, tk, k_total, has_tail):
    """Load a feature tile; zero the ragged K tail (only exists when has_tail)."""
    t = tile_ref[...]
    if has_tail:
        rem = k_total - k * tk                      # >= tk on non-final steps
        col = jax.lax.broadcasted_iota(jnp.int32, t.shape, 1)
        t = jnp.where(col < rem, t, jnp.zeros_like(t))
    return t


# ---------------------------------------------------------------------------
# gram matrix kernel (used once at init to build the style gram)
# ---------------------------------------------------------------------------
def _gram_kernel(*refs, grid_k, k_total, tk, inv_scale, split_rows, has_tail):
    if split_rows:
        lhs_ref, rhs_ref, out_ref = refs
    else:
        lhs_ref, out_ref = refs
        rhs_ref = lhs_ref
    k = pl.program_id(1)

    @pl.when(k == 0)
    def _init():
        out_ref[...] = jnp.zeros_like(out_ref)

    lhs = _masked(lhs_ref, k, tk, k_total, has_tail)
    rhs = lhs if not split_rows else _masked(rhs_ref, k, tk, k_total, has_tail)
    out_ref[...] += jax.lax.dot_general(
        lhs, rhs,
        dimension_numbers=(((1,), (1,)), ((), ())),   # F · Fᵀ (contract h*w)
        preferred_element_type=jnp.float32,
    )

    @pl.when(k == grid_k - 1)
    def _finalize():
        out_ref[...] *= inv_scale


@jax.jit
def gram_matrix(x):
    """Pallas gram matrix of NCHW x -> [b*c, b*c] float32 (matches gram_mtx)."""
    b, c, h, w = x.shape
    m, k = b * c, h * w
    if x.dtype not in (jnp.float32, jnp.bfloat16):
        x = x.astype(jnp.float32)
    feats = x.reshape(m, k)                       # native dtype, no pad/upcast
    p = _plan(m, k, feats.dtype.itemsize)
    inv_scale = 1.0 / float(m * k)

    in_specs = [_feat_spec((p.tm, p.tk), lambda i, kk: (i, kk), p.feat_buffers)]
    args = [feats]
    if p.split_rows:
        in_specs.append(pl.BlockSpec((m, p.tk), lambda i, kk: (0, kk)))
        args.append(feats)

    kernel = functools.partial(
        _gram_kernel, grid_k=p.grid_k, k_total=k, tk=p.tk,
        inv_scale=inv_scale, split_rows=p.split_rows, has_tail=p.has_tail)

    return pl.pallas_call(
        kernel,
        out_shape=jax.ShapeDtypeStruct((m, m), jnp.float32),
        grid_spec=pltpu.PrefetchScalarGridSpec(
            num_scalar_prefetch=0,
            grid=(p.grid_m, p.grid_k),
            in_specs=in_specs,
            out_specs=pl.BlockSpec((p.tm, m), lambda i, kk: (i, 0)),  # resident acc
        ),
        compiler_params=pltpu.CompilerParams(
            dimension_semantics=("parallel", "arbitrary"),
            vmem_limit_bytes=p.vmem_limit),
        cost_estimate=pl.CostEstimate(
            flops=2 * m * m * k,
            transcendentals=0,
            bytes_accessed=m * k * feats.dtype.itemsize * (2 if p.split_rows else 1)
                           + m * m * 4),
    )(*args)


# ---------------------------------------------------------------------------
# forward-pass kernel: gram(gen) accumulated in VMEM, only the per-row-block
# partial SSE against the (HBM-resident, manually DMA'd) style gram is written.
# ---------------------------------------------------------------------------
def _style_loss_kernel(*refs, grid_k, k_total, tk, tm, inv_scale,
                       split_rows, has_tail):
    if split_rows:
        lhs_ref, rhs_ref, style_hbm, loss_ref, acc_ref, style_vmem, sem = refs
    else:
        lhs_ref, style_hbm, loss_ref, acc_ref, style_vmem, sem = refs
        rhs_ref = lhs_ref
    i = pl.program_id(0)
    k = pl.program_id(1)
    style_rows = style_hbm.at[pl.ds(i * tm, tm), :]

    @pl.when(k == 0)
    def _init():
        acc_ref[...] = jnp.zeros_like(acc_ref)
        # Single-buffered manual DMA of the never-changing style rows; it is
        # fully hidden behind the K reduction (waited on only at the last step).
        pltpu.make_async_copy(style_rows, style_vmem, sem.at[0]).start()

    lhs = _masked(lhs_ref, k, tk, k_total, has_tail)
    rhs = lhs if not split_rows else _masked(rhs_ref, k, tk, k_total, has_tail)
    acc_ref[...] += jax.lax.dot_general(
        lhs, rhs,
        dimension_numbers=(((1,), (1,)), ((), ())),
        preferred_element_type=jnp.float32,
    )

    @pl.when(k == grid_k - 1)
    def _finalize():
        pltpu.make_async_copy(style_rows, style_vmem, sem.at[0]).wait()
        diff = acc_ref[...] * inv_scale - style_vmem[...]
        loss_ref[0, 0] = jnp.sum(diff * diff)       # per-row-block partial SSE


@jax.jit
def style_loss_forward(gen, style_gram):
    """StyleLoss.forward: returns (gen unchanged, mse(gram(gen), style_gram))."""
    b, c, h, w = gen.shape
    m, k = b * c, h * w
    x = gen
    if x.dtype not in (jnp.float32, jnp.bfloat16):
        x = x.astype(jnp.float32)
    feats = x.reshape(m, k)                       # native dtype, no pad/upcast
    p = _plan(m, k, feats.dtype.itemsize)
    inv_scale = 1.0 / float(m * k)
    style_f32 = style_gram.astype(jnp.float32)

    in_specs = [_feat_spec((p.tm, p.tk), lambda i, kk: (i, kk), p.feat_buffers)]
    args = [feats]
    if p.split_rows:
        in_specs.append(pl.BlockSpec((m, p.tk), lambda i, kk: (0, kk)))
        args.append(feats)
    in_specs.append(pl.BlockSpec(memory_space=pl.ANY))   # style gram stays in HBM
    args.append(style_f32)

    if p.grid_m == 1:
        out_shape = jax.ShapeDtypeStruct((1, 1), jnp.float32)
        out_spec = pl.BlockSpec(memory_space=pltpu.MemorySpace.SMEM)
    else:
        out_shape = jax.ShapeDtypeStruct((p.grid_m, 1), jnp.float32)
        out_spec = pl.BlockSpec((1, 1), lambda i, kk: (i, 0),
                                memory_space=pltpu.MemorySpace.SMEM)

    kernel = functools.partial(
        _style_loss_kernel, grid_k=p.grid_k, k_total=k, tk=p.tk, tm=p.tm,
        inv_scale=inv_scale, split_rows=p.split_rows, has_tail=p.has_tail)

    partial_sse = pl.pallas_call(
        kernel,
        out_shape=out_shape,
        grid_spec=pltpu.PrefetchScalarGridSpec(
            num_scalar_prefetch=0,
            grid=(p.grid_m, p.grid_k),
            in_specs=in_specs,
            out_specs=out_spec,
            scratch_shapes=[
                pltpu.VMEM((p.tm, m), jnp.float32),   # resident gram accumulator
                pltpu.VMEM((p.tm, m), jnp.float32),   # style rows (manual DMA)
                pltpu.SemaphoreType.DMA((1,)),
            ]),
        compiler_params=pltpu.CompilerParams(
            dimension_semantics=("parallel", "arbitrary"),
            vmem_limit_bytes=p.vmem_limit),
        cost_estimate=pl.CostEstimate(
            flops=2 * m * m * k + 3 * m * m,
            transcendentals=0,
            bytes_accessed=m * k * feats.dtype.itemsize * (2 if p.split_rows else 1)
                           + m * m * 4 + p.grid_m * 4),
    )(*args)

    loss = jnp.sum(partial_sse) * (1.0 / float(m * m))
    # StyleLoss.forward returns its input unchanged; loss is a side output.
    return gen, loss


class StyleLossPallas:
    """JAX/Pallas port of the PyTorch StyleLoss module."""

    def __init__(self, style):
        self.style = gram_matrix(style)   # precomputed, detached style gram
        self.loss = None

    def __call__(self, gen):
        out, self.loss = style_loss_forward(gen, self.style)
        return out


def _reference_loss(gen, style):
    def gram(x):
        b, c, h, w = x.shape
        f = x.reshape(b * c, h * w).astype(jnp.float32)
        return (f @ f.T) / (b * c * h * w)
    d = gram(gen) - gram(style)
    return jnp.mean(d * d)


if __name__ == "__main__":
    key = jax.random.PRNGKey(0)
    k1, k2 = jax.random.split(key)
    # Small NCHW conv-feature-like inputs.
    gen = jax.random.normal(k1, (2, 4, 16, 16), dtype=jnp.float32)
    style = jax.random.normal(k2, (2, 4, 16, 16), dtype=jnp.float32)

    module = StyleLossPallas(style)
    out = jax.block_until_ready(module(gen))
    loss = jax.block_until_ready(module.loss)

    ref = _reference_loss(gen, style)
    assert out.shape == gen.shape
    assert bool(jnp.allclose(out, gen))
    assert bool(jnp.allclose(loss, ref, rtol=1e-5, atol=1e-6)), (loss, ref)

    print("KERNEL_OK")
</pallas_src>

<mosaic_0001>
module attributes {stable_mosaic.version = 11 : i64} {
  func.func @_gram_kernel(%arg0: i32, %arg1: i32, %arg2: memref<8x256xf32, #tpu.memory_space<vmem>>, %arg3: memref<8x8xf32, #tpu.memory_space<vmem>>) attributes {dimension_semantics = [#tpu.dimension_semantics<parallel>, #tpu.dimension_semantics<arbitrary>], iteration_bounds = array<i64: 1, 1>, scalar_prefetch = 0 : i64, scratch_operands = 0 : i64, tpu.core_type = #tpu.core_type<tc>, window_params = [{transform_indices = @transform_0, window_bounds = array<i64: 8, 256>}, {transform_indices = @transform_1, window_bounds = array<i64: 8, 8>}]} {
    %c0_i32 = arith.constant 0 : i32
    %0 = arith.cmpi eq, %arg1, %c0_i32 : i32
    %1 = arith.extui %0 : i1 to i32
    %c0_i32_0 = arith.constant 0 : i32
    %2 = arith.cmpi ne, %1, %c0_i32_0 : i32
    scf.if %2 {
      %cst_8 = arith.constant 0.000000e+00 : f32
      %11 = vector.broadcast %cst_8 : f32 to vector<8x8xf32>
      %c0_9 = arith.constant 0 : index
      %c0_10 = arith.constant 0 : index
      %12 = vector.load %arg3[%c0_9, %c0_10] : memref<8x8xf32, #tpu.memory_space<vmem>>, vector<8x8xf32>
      tpu.vector_store %arg3[%c0_9, %c0_10], %11 {strides = array<i32>} : memref<8x8xf32, #tpu.memory_space<vmem>>, vector<8x8xf32>,
    } else {
    }
    %c0 = arith.constant 0 : index
    %c0_1 = arith.constant 0 : index
    %3 = vector.load %arg2[%c0, %c0_1] : memref<8x256xf32, #tpu.memory_space<vmem>>, vector<8x256xf32>
    %c0_2 = arith.constant 0 : index
    %c0_3 = arith.constant 0 : index
    %4 = vector.load %arg3[%c0_2, %c0_3] : memref<8x8xf32, #tpu.memory_space<vmem>>, vector<8x8xf32>
    %cst = arith.constant dense<0.000000e+00> : vector<8x8xf32>
    %5 = tpu.matmul %3, %3, %cst {dimension_numbers = #tpu.dot_dimension_numbers<[1], [1], [0], [0], [0, 0, 1, 0], [], []>} : vector<8x256xf32>, vector<8x256xf32>, vector<8x8xf32> -> vector<8x8xf32>
    %6 = arith.addf %4, %5 : vector<8x8xf32>
    %c0_4 = arith.constant 0 : index
    %c0_5 = arith.constant 0 : index
    %7 = vector.load %arg3[%c0_4, %c0_5] : memref<8x8xf32, #tpu.memory_space<vmem>>, vector<8x8xf32>
    tpu.vector_store %arg3[%c0_4, %c0_5], %6 {strides = array<i32>} : memref<8x8xf32, #tpu.memory_space<vmem>>, vector<8x8xf32>,
    %c0_i32_6 = arith.constant 0 : i32
    %8 = arith.cmpi eq, %arg1, %c0_i32_6 : i32
    %9 = arith.extui %8 : i1 to i32
    %c0_i32_7 = arith.constant 0 : i32
    %10 = arith.cmpi ne, %9, %c0_i32_7 : i32
    scf.if %10 {
      %c0_8 = arith.constant 0 : index
      %c0_9 = arith.constant 0 : index
      %11 = vector.load %arg3[%c0_8, %c0_9] : memref<8x8xf32, #tpu.memory_space<vmem>>, vector<8x8xf32>
      %cst_10 = arith.constant 4.8828125E-4 : f32
      %12 = vector.broadcast %cst_10 : f32 to vector<8x8xf32>
      %13 = arith.mulf %11, %12 : vector<8x8xf32>
      %c0_11 = arith.constant 0 : index
      %c0_12 = arith.constant 0 : index
      %14 = vector.load %arg3[%c0_11, %c0_12] : memref<8x8xf32, #tpu.memory_space<vmem>>, vector<8x8xf32>
      tpu.vector_store %arg3[%c0_11, %c0_12], %13 {strides = array<i32>} : memref<8x8xf32, #tpu.memory_space<vmem>>, vector<8x8xf32>,
    } else {
    }
    return
  }
  func.func @transform_0(%arg0: i32, %arg1: i32) -> (i32, i32) {
    %c0_i32 = arith.constant 0 : i32
    return %arg0, %arg1 : i32, i32
  }
  func.func @transform_1(%arg0: i32, %arg1: i32) -> (i32, i32) {
    %c0_i32 = arith.constant 0 : i32
    %c0_i32_0 = arith.constant 0 : i32
    return %arg0, %c0_i32 : i32, i32
  }
}

</mosaic_0001>

<llo_original>
// kernel: gram_matrix.1
$region0: #{gram_matrix.1}
  #allocation0 [shape = 'u32[]', space=smem, size = 0x4, offset = 0x4, fixed_abs, tag = 'smem constant byte address 0x4 - core index']
  #allocation1 [shape = 'u32[144,128]{1,0:T(1,128)}', space=vmem, size = 0x12000, scoped, tag = 'internal scratch']
  %s0 = inlined_call_operand.hbm [shape: f32[8,256], index: 0, kind: input, shape index: {}]
  %s1 = inlined_call_operand.hbm [shape: f32[8,8], index: 1, kind: output, shape index: {}]
  %s2 = sld [smem:[#allocation0]]
  $region26: #{gram_matrix.1} parent=0
    _
  %s4 = ssub.s32 1, %s2
  %s5 = scalar_select 0, %s4, %s2
  $region1: #{gram_matrix.1} parent=0
    #allocation2 [shape = 'u8[8192]{0}', space=vmem, size = 0x2000, scoped, tag = 'input window, operand 0, single buffered']
    #allocation3 [shape = 's32[1]{0}', space=sflag, size = 0x4, scoped, tag = 'scoped memory for gram_matrix.1']
    #allocation4 [shape = 's32[1]{0}', space=sflag, size = 0x4, scoped, tag = 'scoped memory for gram_matrix.1']
    #allocation5 [shape = 'u8[4096]{0}', space=vmem, size = 0x1000, scoped, tag = 'output window, operand 0, single buffered']
    %6 = vsyncpa [#allocation3], 0
    %7 = vsyncpa [#allocation4], 0
    // Predicated region
    $region2: #{gram_matrix.1} parent=1 // pred_check
      _
    $region3: #{gram_matrix.1} parent=1 // pred_check_branch
      %9 = sbr.rel (0) target = $region5
    $region4: #{gram_matrix.1} parent=1 // pred_region
      %s11 = ssub.s32 256, 256
      %12 = vsyncadd [#allocation3], %s11
      %s14 = sshll.u32 [#allocation2], 4
      %s15 = int_to_ptr.vmem [resolvable:$true] %s14
      %17 = dma.hbm_to_vmem [thread:$0]  %s0, 256, %s15, [#allocation3]
    $region5: #{gram_matrix.1} parent=1 // pred_fallthru
      _
    // Predicated region
    $region6: #{gram_matrix.1} parent=1 // pred_check
      _
    $region7: #{gram_matrix.1} parent=1 // pred_check_branch
      %19 = sbr.rel (0) target = $region9
    $region8: #{gram_matrix.1} parent=1 // pred_region
      %20 = dma.done [#allocation3], 256
    $region9: #{gram_matrix.1} parent=1 // pred_fallthru
      _
    %p21 = scmp.eq.s32.totalorder 0, 0
    // Predicated region
    $region10: #{gram_matrix.1} parent=1 // pred_check
      %p22 = pneg %p21
    $region11: #{gram_matrix.1} parent=1 // pred_check_branch
      %24 = sbr.rel (%p22) target = $region13
    $region12: #{gram_matrix.1} parent=1 // pred_region
      %vm25 = vcmask 64512
      %26 = vst.msk [vmem:[#allocation5] sm:$0xff] %vm25, 0.0
    $region13: #{gram_matrix.1} parent=1 // pred_fallthru
      _
    %v27 = vld [vmem:[#allocation2] sm:$0xff]
    %v28 = vld [vmem:[#allocation2 + $0x8] sm:$0xff]
    %v29 = vld [vmem:[#allocation5] sm:$0xff]
    %30 = vmatprep.subr.mxu0 %v28
    %31 = vmatpush1.xpose.msra.mxu0 %v27
    %32 = vmatprep.subr.mxu0 0.0
    %33 = vmatpush1.xpose.msra.mxu0 0.0
    %34 = vmatprep.subr.mxu0 0.0
    %35 = vmatpush1.xpose.msra.mxu0 0.0
    %36 = vmatprep.subr.mxu0 0.0
    %37 = vmatpush1.xpose.msra.mxu0 0.0
    %38 = vmatprep.subr.mxu0 0.0
    %39 = vmatpush1.xpose.msra.mxu0 0.0
    %40 = vmatprep.subr.mxu0 0.0
    %41 = vmatpush1.xpose.msra.mxu0 0.0
    %42 = vmatprep.subr.mxu0 0.0
    %43 = vmatpush1.xpose.msra.mxu0 0.0
    %44 = vmatprep.subr.mxu0 0.0
    %45 = vmatpush1.xpose.msra.mxu0 0.0
    %46 = vmatprep.subr.mxu0 0.0
    %47 = vmatpush1.xpose.msra.mxu0 0.0
    %48 = vmatprep.subr.mxu0 0.0
    %49 = vmatpush1.xpose.msra.mxu0 0.0
    %50 = vmatprep.subr.mxu0 0.0
    %51 = vmatpush1.xpose.msra.mxu0 0.0
    %52 = vmatprep.subr.mxu0 0.0
    %53 = vmatpush1.xpose.msra.mxu0 0.0
    %54 = vmatprep.subr.mxu0 0.0
    %55 = vmatpush1.xpose.msra.mxu0 0.0
    %56 = vmatprep.subr.mxu0 0.0
    %57 = vmatpush1.xpose.msra.mxu0 0.0
    %58 = vmatprep.subr.mxu0 0.0
    %59 = vmatpush1.xpose.msra.mxu0 0.0
    %60 = vmatprep.subr.mxu0 0.0
    %61 = vmatpush1.xpose.msra.mxu0 0.0
    %62 = vmatprep.subr.mxu0 0.0
    %63 = vmatpush1.xpose.msra.mxu0 0.0
    %64 = vmatprep.subr.mxu0 0.0
    %65 = vmatpush1.xpose.msra.mxu0 0.0
    %66 = vmatprep.subr.mxu0 0.0
    %67 = vmatpush1.xpose.msra.mxu0 0.0
    %68 = vmatprep.subr.mxu0 0.0
    %69 = vmatpush1.xpose.msra.mxu0 0.0
    %70 = vmatprep.subr.mxu0 0.0
    %71 = vmatpush1.xpose.msra.mxu0 0.0
    %72 = vmatprep.subr.mxu0 0.0
    %73 = vmatpush1.xpose.msra.mxu0 0.0
    %74 = vmatprep.subr.mxu0 0.0
    %75 = vmatpush1.xpose.msra.mxu0 0.0
    %76 = vmatprep.subr.mxu0 0.0
    %77 = vmatpush1.xpose.msra.mxu0 0.0
    %78 = vmatprep.subr.mxu0 0.0
    %79 = vmatpush1.xpose.msra.mxu0 0.0
    %80 = vmatprep.subr.mxu0 0.0
    %81 = vmatpush1.xpose.msra.mxu0 0.0
    %82 = vmatprep.subr.mxu0 0.0
    %83 = vmatpush1.xpose.msra.mxu0 0.0
    %84 = vmatprep.subr.mxu0 0.0
    %85 = vmatpush1.xpose.msra.mxu0 0.0
    %86 = vmatprep.subr.mxu0 0.0
    %87 = vmatpush1.xpose.msra.mxu0 0.0
    %88 = vmatprep.subr.mxu0 0.0
    %89 = vmatpush1.xpose.msra.mxu0 0.0
    %90 = vmatprep.subr.mxu0 0.0
    %91 = vmatpush1.xpose.msra.mxu0 0.0
    %92 = vmatprep.subr.mxu0 0.0
    %93 = vmatpush1.xpose.msra.mxu0 0.0
    %94 = vmatprep.mubr.f32.mxu0 %v28
    %95 = vmatmul.mubr.f32.gmra.mrb[0].mxu0 %v27
    %v96 = vpop.f32.mrb[0].mxu0
    %v97 = vadd.f32 0.0, %v96
    %v98 = vpop.f32.mrb[0].mxu0
    %99 = vdwg.mxu0
    %v100 = vadd.f32 %v29, %v97
    %vm101 = vcmask 64512
    %102 = vst.msk [vmem:[#allocation5] sm:$0xff] %vm101, %v100
    // Predicated region
    $region14: #{gram_matrix.1} parent=1 // pred_check
      %p103 = pneg %p21
    $region15: #{gram_matrix.1} parent=1 // pred_check_branch
      %105 = sbr.rel (%p103) target = $region17
    $region16: #{gram_matrix.1} parent=1 // pred_region
      %v106 = vld [vmem:[#allocation5] sm:$0xff]
      %v107 = vmul.f32 %v106, 0.00048828125
      %108 = vst.msk [vmem:[#allocation5] sm:$0xff] %vm101, %v107
    $region17: #{gram_matrix.1} parent=1 // pred_fallthru
      _
    // Predicated region
    $region18: #{gram_matrix.1} parent=1 // pred_check
      _
    $region19: #{gram_matrix.1} parent=1 // pred_check_branch
      %110 = sbr.rel (0) target = $region21
    $region20: #{gram_matrix.1} parent=1 // pred_region
      %s112 = ssub.s32 128, 128
      %113 = vsyncadd [#allocation4], %s112
      %s115 = sshll.u32 [#allocation5], 4
      %s116 = int_to_ptr.vmem [resolvable:$true] %s115
      %118 = dma.vmem_to_hbm [thread:$0]  %s116, 128, %s1, [#allocation4]
    $region21: #{gram_matrix.1} parent=1 // pred_fallthru
      _
    // Predicated region
    $region22: #{gram_matrix.1} parent=1 // pred_check
      _
    $region23: #{gram_matrix.1} parent=1 // pred_check_branch
      %120 = sbr.rel (0) target = $region25
    $region24: #{gram_matrix.1} parent=1 // pred_region
      %121 = dma.done [#allocation4], 128
    $region25: #{gram_matrix.1} parent=1 // pred_fallthru
      _
    %122 = vsyncpa [#allocation3], 1
    %123 = vsyncpa [#allocation4], 1

</llo_original>
